<compile_context>
chip_gen: v5e
topology: v5e:2x2
jax: 0.10.0
libtpu: 0.0.40
codegen_flags: <defaults>
</compile_context>

<pallas_src>
import jax
import jax.numpy as jnp
from jax.experimental import pallas as pl
from jax.experimental.pallas import tpu as pltpu

NUM_CLASSES = 10          # config.num_classes
IN_FEATURES = 1480
K_PAD = 1536              # 1480 padded up to 12 * 128
H1, H2 = 128, 32
OUT_PAD = 128             # num_classes padded to a lane-dense 128


def _mlp_kernel(x_ref, w1_ref, b1_ref, w2_ref, b2_ref, w3_ref, b3_ref, o_ref):
    # fc1: bf16 x bf16 on the MXU, f32 accumulate, then bias + ReLU.
    h1 = jnp.dot(x_ref[...], w1_ref[...], preferred_element_type=jnp.float32)
    h1 = jnp.maximum(h1 + b1_ref[...], 0.0)
    # fc2 + ReLU (tiny f32 matmul).
    h2 = jnp.dot(h1, w2_ref[...], preferred_element_type=jnp.float32)
    h2 = jnp.maximum(h2 + b2_ref[...], 0.0)
    # out: lane-padded to 128 columns (padded weight/bias columns are zero).
    o = jnp.dot(h2, w3_ref[...], preferred_element_type=jnp.float32)
    o_ref[...] = (o + b3_ref[...]).astype(o_ref.dtype)


def _round_up(x, m):
    return ((x + m - 1) // m) * m


def darknet_mlp(x, w1, b1, w2, b2, w3, b3, *, num_classes=NUM_CLASSES, tb=512):
    """Forward pass of the Darknet classifier head.

    x : (B, 1480) f32
    w1: (K_PAD, 128) bf16 (zero-padded along K),  b1: (1, 128) f32
    w2: (128, 32)   f32,                          b2: (1, 32)  f32
    w3: (32, OUT_PAD) f32 (zero-padded columns),  b3: (1, OUT_PAD) f32
    returns (B, num_classes) f32
    """
    B = x.shape[0]
    TB = min(tb, _round_up(B, 8))
    B_pad = _round_up(B, TB)

    # bf16 activations for the dominant (x @ w1) DMA/MXU path; zero-pad the
    # batch to a TB multiple and the contraction dim to 1536.
    xp = jnp.pad(x.astype(jnp.bfloat16),
                 ((0, B_pad - B), (0, K_PAD - x.shape[1])))

    grid = (B_pad // TB,)
    const = lambda shape: pl.BlockSpec(shape, lambda i: (0, 0))

    flops = 2 * B_pad * (K_PAD * H1 + H1 * H2 + H2 * OUT_PAD)
    bytes_accessed = (xp.size * 2 + w1.size * 2
                      + (b1.size + w2.size + b2.size + w3.size + b3.size) * 4
                      + B_pad * OUT_PAD * 4)

    out = pl.pallas_call(
        _mlp_kernel,
        out_shape=jax.ShapeDtypeStruct((B_pad, OUT_PAD), jnp.float32),
        grid=grid,
        in_specs=[
            pl.BlockSpec((TB, K_PAD), lambda i: (i, 0)),   # x: tiled over batch
            const(w1.shape), const(b1.shape),              # weights stay resident
            const(w2.shape), const(b2.shape),
            const(w3.shape), const(b3.shape),
        ],
        out_specs=pl.BlockSpec((TB, OUT_PAD), lambda i: (i, 0)),
        compiler_params=pltpu.CompilerParams(
            dimension_semantics=("parallel",),
        ),
        cost_estimate=pl.CostEstimate(
            flops=flops, transcendentals=0, bytes_accessed=bytes_accessed),
    )(xp, w1, b1, w2, b2, w3, b3)

    return out[:B, :num_classes]


def init_params(key, num_classes=NUM_CLASSES):
    """Deterministic synthetic parameters matching nn.Linear shapes.

    Returns (kernel_params, ref_params): kernel params are pre-transposed to
    (in, out), with w1 stored bf16 + K-padded and w3/b3 lane-padded to 128.
    """
    k1, k2, k3, k4, k5, k6 = jax.random.split(key, 6)

    def linear(kw, kb, fan_in, fan_out):
        bound = 1.0 / jnp.sqrt(fan_in)
        # PyTorch stores (out, in); we pre-transpose to (in, out) for x @ W.
        w = jax.random.uniform(kw, (fan_in, fan_out), jnp.float32, -bound, bound)
        b = jax.random.uniform(kb, (1, fan_out), jnp.float32, -bound, bound)
        return w, b

    w1, b1 = linear(k1, k2, IN_FEATURES, H1)
    w2, b2 = linear(k3, k4, H1, H2)
    w3, b3 = linear(k5, k6, H2, num_classes)

    w1_k = jnp.pad(w1, ((0, K_PAD - IN_FEATURES), (0, 0))).astype(jnp.bfloat16)
    w3_k = jnp.pad(w3, ((0, 0), (0, OUT_PAD - num_classes)))
    b3_k = jnp.pad(b3, ((0, 0), (0, OUT_PAD - num_classes)))

    kernel_params = (w1_k, b1, w2, b2, w3_k, b3_k)
    ref_params = (w1, b1, w2, b2, w3, b3)
    return kernel_params, ref_params


def reference(x, w1, b1, w2, b2, w3, b3):
    # Mirror the kernel's bf16 storage of x and w1 (bf16 products are exact in
    # f32; only accumulation order differs), rest in f32.
    xb = x.astype(jnp.bfloat16).astype(jnp.float32)
    w1b = w1.astype(jnp.bfloat16).astype(jnp.float32)
    h1 = jnp.maximum(xb @ w1b + b1, 0.0)
    h2 = jnp.maximum(h1 @ w2 + b2, 0.0)
    return h2 @ w3 + b3


if __name__ == "__main__":
    key = jax.random.PRNGKey(0)
    kx, kp = jax.random.split(key)

    B = 8
    x = jax.random.normal(kx, (B, IN_FEATURES), jnp.float32)
    kernel_params, ref_params = init_params(kp)

    out = jax.block_until_ready(darknet_mlp(x, *kernel_params))
    ref = reference(x, *ref_params)

    assert out.shape == (B, NUM_CLASSES), out.shape
    max_err = float(jnp.max(jnp.abs(out - ref)))
    assert jnp.allclose(out, ref, atol=1e-2, rtol=1e-2), max_err
    print("KERNEL_OK")
</pallas_src>

<mosaic_0001>
module attributes {stable_mosaic.version = 11 : i64} {
  func.func @_mlp_kernel(%arg0: i32, %arg1: memref<8x1536xbf16, #tpu.memory_space<vmem>>, %arg2: memref<1536x128xbf16, #tpu.memory_space<vmem>>, %arg3: memref<1x128xf32, #tpu.memory_space<vmem>>, %arg4: memref<128x32xf32, #tpu.memory_space<vmem>>, %arg5: memref<1x32xf32, #tpu.memory_space<vmem>>, %arg6: memref<32x128xf32, #tpu.memory_space<vmem>>, %arg7: memref<1x128xf32, #tpu.memory_space<vmem>>, %arg8: memref<8x128xf32, #tpu.memory_space<vmem>>) attributes {dimension_semantics = [#tpu.dimension_semantics<parallel>], iteration_bounds = array<i64: 1>, scalar_prefetch = 0 : i64, scratch_operands = 0 : i64, tpu.core_type = #tpu.core_type<tc>, window_params = [{transform_indices = @transform_0, window_bounds = array<i64: 8, 1536>}, {pipeline_mode = #tpu.pipeline_mode<synchronous>, transform_indices = @transform_1, window_bounds = array<i64: 1536, 128>}, {pipeline_mode = #tpu.pipeline_mode<synchronous>, transform_indices = @transform_2, window_bounds = array<i64: 1, 128>}, {pipeline_mode = #tpu.pipeline_mode<synchronous>, transform_indices = @transform_3, window_bounds = array<i64: 128, 32>}, {pipeline_mode = #tpu.pipeline_mode<synchronous>, transform_indices = @transform_4, window_bounds = array<i64: 1, 32>}, {pipeline_mode = #tpu.pipeline_mode<synchronous>, transform_indices = @transform_5, window_bounds = array<i64: 32, 128>}, {pipeline_mode = #tpu.pipeline_mode<synchronous>, transform_indices = @transform_6, window_bounds = array<i64: 1, 128>}, {transform_indices = @transform_7, window_bounds = array<i64: 8, 128>}]} {
    %c0 = arith.constant 0 : index
    %c0_0 = arith.constant 0 : index
    %0 = vector.load %arg1[%c0, %c0_0] : memref<8x1536xbf16, #tpu.memory_space<vmem>>, vector<8x1536xbf16>
    %c0_1 = arith.constant 0 : index
    %c0_2 = arith.constant 0 : index
    %1 = vector.load %arg2[%c0_1, %c0_2] : memref<1536x128xbf16, #tpu.memory_space<vmem>>, vector<1536x128xbf16>
    %cst = arith.constant dense<0.000000e+00> : vector<8x128xf32>
    %2 = tpu.matmul %0, %1, %cst {dimension_numbers = #tpu.dot_dimension_numbers<[1], [0], [0], [1], [0, 0, 1, 1], [], []>} : vector<8x1536xbf16>, vector<1536x128xbf16>, vector<8x128xf32> -> vector<8x128xf32>
    %c0_3 = arith.constant 0 : index
    %c0_4 = arith.constant 0 : index
    %3 = vector.load %arg3[%c0_3, %c0_4] : memref<1x128xf32, #tpu.memory_space<vmem>>, vector<1x128xf32>
    %4 = vector.broadcast %3 : vector<1x128xf32> to vector<8x128xf32>
    %5 = arith.addf %2, %4 : vector<8x128xf32>
    %cst_5 = arith.constant 0.000000e+00 : f32
    %6 = vector.broadcast %cst_5 : f32 to vector<8x128xf32>
    %7 = arith.maximumf %5, %6 : vector<8x128xf32>
    %c0_6 = arith.constant 0 : index
    %c0_7 = arith.constant 0 : index
    %8 = vector.load %arg4[%c0_6, %c0_7] : memref<128x32xf32, #tpu.memory_space<vmem>>, vector<128x32xf32>
    %cst_8 = arith.constant dense<0.000000e+00> : vector<8x32xf32>
    %9 = tpu.matmul %7, %8, %cst_8 {dimension_numbers = #tpu.dot_dimension_numbers<[1], [0], [0], [1], [0, 0, 1, 1], [], []>} : vector<8x128xf32>, vector<128x32xf32>, vector<8x32xf32> -> vector<8x32xf32>
    %c0_9 = arith.constant 0 : index
    %c0_10 = arith.constant 0 : index
    %10 = vector.load %arg5[%c0_9, %c0_10] : memref<1x32xf32, #tpu.memory_space<vmem>>, vector<1x32xf32>
    %11 = vector.broadcast %10 : vector<1x32xf32> to vector<8x32xf32>
    %12 = arith.addf %9, %11 : vector<8x32xf32>
    %cst_11 = arith.constant 0.000000e+00 : f32
    %13 = vector.broadcast %cst_11 : f32 to vector<8x32xf32>
    %14 = arith.maximumf %12, %13 : vector<8x32xf32>
    %c0_12 = arith.constant 0 : index
    %c0_13 = arith.constant 0 : index
    %15 = vector.load %arg6[%c0_12, %c0_13] : memref<32x128xf32, #tpu.memory_space<vmem>>, vector<32x128xf32>
    %cst_14 = arith.constant dense<0.000000e+00> : vector<8x128xf32>
    %16 = tpu.matmul %14, %15, %cst_14 {dimension_numbers = #tpu.dot_dimension_numbers<[1], [0], [0], [1], [0, 0, 1, 1], [], []>} : vector<8x32xf32>, vector<32x128xf32>, vector<8x128xf32> -> vector<8x128xf32>
    %c0_15 = arith.constant 0 : index
    %c0_16 = arith.constant 0 : index
    %17 = vector.load %arg7[%c0_15, %c0_16] : memref<1x128xf32, #tpu.memory_space<vmem>>, vector<1x128xf32>
    %18 = vector.broadcast %17 : vector<1x128xf32> to vector<8x128xf32>
    %19 = arith.addf %16, %18 : vector<8x128xf32>
    %c0_17 = arith.constant 0 : index
    %c0_18 = arith.constant 0 : index
    %20 = vector.load %arg8[%c0_17, %c0_18] : memref<8x128xf32, #tpu.memory_space<vmem>>, vector<8x128xf32>
    tpu.vector_store %arg8[%c0_17, %c0_18], %19 {strides = array<i32>} : memref<8x128xf32, #tpu.memory_space<vmem>>, vector<8x128xf32>,
    return
  }
  func.func @transform_0(%arg0: i32) -> (i32, i32) {
    %c0_i32 = arith.constant 0 : i32
    %c0_i32_0 = arith.constant 0 : i32
    return %arg0, %c0_i32 : i32, i32
  }
  func.func @transform_1(%arg0: i32) -> (i32, i32) {
    %c0_i32 = arith.constant 0 : i32
    %c0_i32_0 = arith.constant 0 : i32
    %c0_i32_1 = arith.constant 0 : i32
    return %c0_i32, %c0_i32_0 : i32, i32
  }
  func.func @transform_2(%arg0: i32) -> (i32, i32) {
    %c0_i32 = arith.constant 0 : i32
    %c0_i32_0 = arith.constant 0 : i32
    %c0_i32_1 = arith.constant 0 : i32
    return %c0_i32, %c0_i32_0 : i32, i32
  }
  func.func @transform_3(%arg0: i32) -> (i32, i32) {
    %c0_i32 = arith.constant 0 : i32
    %c0_i32_0 = arith.constant 0 : i32
    %c0_i32_1 = arith.constant 0 : i32
    return %c0_i32, %c0_i32_0 : i32, i32
  }
  func.func @transform_4(%arg0: i32) -> (i32, i32) {
    %c0_i32 = arith.constant 0 : i32
    %c0_i32_0 = arith.constant 0 : i32
    %c0_i32_1 = arith.constant 0 : i32
    return %c0_i32, %c0_i32_0 : i32, i32
  }
  func.func @transform_5(%arg0: i32) -> (i32, i32) {
    %c0_i32 = arith.constant 0 : i32
    %c0_i32_0 = arith.constant 0 : i32
    %c0_i32_1 = arith.constant 0 : i32
    return %c0_i32, %c0_i32_0 : i32, i32
  }
  func.func @transform_6(%arg0: i32) -> (i32, i32) {
    %c0_i32 = arith.constant 0 : i32
    %c0_i32_0 = arith.constant 0 : i32
    %c0_i32_1 = arith.constant 0 : i32
    return %c0_i32, %c0_i32_0 : i32, i32
  }
  func.func @transform_7(%arg0: i32) -> (i32, i32) {
    %c0_i32 = arith.constant 0 : i32
    %c0_i32_0 = arith.constant 0 : i32
    return %arg0, %c0_i32 : i32, i32
  }
}

</mosaic_0001>

<llo_original>
// kernel: tpu_custom_call.1
$region0: #{tpu_custom_call.1}
  #allocation0 [shape = 'u32[]', space=smem, size = 0x4, offset = 0x4, fixed_abs, tag = 'smem constant byte address 0x4 - core index']
  #allocation1 [shape = 'u32[72,128]{1,0:T(1,128)}', space=vmem, size = 0x9000, scoped, tag = 'internal scratch']
  %s0 = inlined_call_operand.vmem [shape: bf16[8,1536], index: 0, kind: input, shape index: {}]
  %s1 = inlined_call_operand.hbm [shape: bf16[1536,128], index: 1, kind: input, shape index: {}]
  %s2 = inlined_call_operand.vmem [shape: f32[1,128], index: 2, kind: input, shape index: {}]
  %s3 = inlined_call_operand.vmem [shape: f32[128,32], index: 3, kind: input, shape index: {}]
  %s4 = inlined_call_operand.vmem [shape: f32[1,32], index: 4, kind: input, shape index: {}]
  %s5 = inlined_call_operand.vmem [shape: f32[32,128], index: 5, kind: input, shape index: {}]
  %s6 = inlined_call_operand.vmem [shape: f32[1,128], index: 6, kind: input, shape index: {}]
  %s7 = inlined_call_operand.hbm [shape: f32[8,128], index: 7, kind: output, shape index: {}]
  %s8 = sld [smem:[#allocation0]]
  $region42: #{tpu_custom_call.1} parent=0
    _
  %s10 = ssub.s32 1, %s8
  %s11 = scalar_select 0, %s10, %s8
  $region1: #{tpu_custom_call.1} parent=0
    #allocation2 [shape = 'u8[393216]{0}', space=vmem, size = 0x60000, scoped, tag = 'input window, operand 1, single buffered']
    #allocation3 [shape = 's32[1]{0}', space=sflag, size = 0x4, scoped, tag = 'scoped memory for tpu_custom_call.1']
    #allocation4 [shape = 's32[1]{0}', space=sflag, size = 0x4, scoped, tag = 'scoped memory for tpu_custom_call.1']
    #allocation5 [shape = 'u8[4096]{0}', space=vmem, size = 0x1000, scoped, tag = 'output window, operand 0, single buffered']
    %12 = vsyncpa [#allocation3], 0
    %13 = vsyncpa [#allocation4], 0
    // Predicated region
    $region2: #{tpu_custom_call.1} parent=1 // pred_check
      _
    $region3: #{tpu_custom_call.1} parent=1 // pred_check_branch
      %15 = sbr.rel (0) target = $region5
    $region4: #{tpu_custom_call.1} parent=1 // pred_region
      _
    $region5: #{tpu_custom_call.1} parent=1 // pred_fallthru
      _
    // Predicated region
    $region6: #{tpu_custom_call.1} parent=1 // pred_check
      _
    $region7: #{tpu_custom_call.1} parent=1 // pred_check_branch
      %17 = sbr.rel (0) target = $region9
    $region8: #{tpu_custom_call.1} parent=1 // pred_region
      %19 = vsyncadd [#allocation3], 0
      %s20 = sshll.u32 %s1, 4
      %s21 = int_to_ptr.hbm [resolvable:$true] %s20
      %s22 = sshll.u32 [#allocation2], 4
      %s23 = int_to_ptr.vmem [resolvable:$true] %s22
      %28 = dma.hbm_to_vmem [thread:$0]  %s21, 12288, %s23, [#allocation3], 64, 64, 4
    $region9: #{tpu_custom_call.1} parent=1 // pred_fallthru
      _
    // Predicated region
    $region10: #{tpu_custom_call.1} parent=1 // pred_check
      _
    $region11: #{tpu_custom_call.1} parent=1 // pred_check_branch
      %30 = sbr.rel (0) target = $region13
    $region12: #{tpu_custom_call.1} parent=1 // pred_region
      _
    $region13: #{tpu_custom_call.1} parent=1 // pred_fallthru
      _
    // Predicated region
    $region14: #{tpu_custom_call.1} parent=1 // pred_check
      _
    $region15: #{tpu_custom_call.1} parent=1 // pred_check_branch
      %32 = sbr.rel (0) target = $region17
    $region16: #{tpu_custom_call.1} parent=1 // pred_region
      _
    $region17: #{tpu_custom_call.1} parent=1 // pred_fallthru
      _
    // Predicated region
    $region18: #{tpu_custom_call.1} parent=1 // pred_check
      _
    $region19: #{tpu_custom_call.1} parent=1 // pred_check_branch
      %34 = sbr.rel (0) target = $region21
    $region20: #{tpu_custom_call.1} parent=1 // pred_region
      _
    $region21: #{tpu_custom_call.1} parent=1 // pred_fallthru
      _
    // Predicated region
    $region22: #{tpu_custom_call.1} parent=1 // pred_check
      _
    $region23: #{tpu_custom_call.1} parent=1 // pred_check_branch
      %36 = sbr.rel (0) target = $region25
    $region24: #{tpu_custom_call.1} parent=1 // pred_region
      _
    $region25: #{tpu_custom_call.1} parent=1 // pred_fallthru
      _
    // Predicated region
    $region26: #{tpu_custom_call.1} parent=1 // pred_check
      _
    $region27: #{tpu_custom_call.1} parent=1 // pred_check_branch
      %38 = sbr.rel (0) target = $region29
    $region28: #{tpu_custom_call.1} parent=1 // pred_region
      _
    $region29: #{tpu_custom_call.1} parent=1 // pred_fallthru
      _
    // Predicated region
    $region30: #{tpu_custom_call.1} parent=1 // pred_check
      _
    $region31: #{tpu_custom_call.1} parent=1 // pred_check_branch
      %40 = sbr.rel (0) target = $region33
    $region32: #{tpu_custom_call.1} parent=1 // pred_region
      %42 = dma.done [#allocation3], 12288
    $region33: #{tpu_custom_call.1} parent=1 // pred_fallthru
      _
    %v43 = vld [vmem:[%s0] sm:$0xff]
    %v44 = vld [vmem:[%s0 + $0x8] sm:$0xff]
    %v45 = vld [vmem:[%s0 + $0x10] sm:$0xff]
    %v46 = vld [vmem:[%s0 + $0x18] sm:$0xff]
    %v47 = vld [vmem:[%s0 + $0x20] sm:$0xff]
    %v48 = vld [vmem:[%s0 + $0x28] sm:$0xff]
    %v49 = vld [vmem:[#allocation2] sm:$0xf]
    %v50 = vld [vmem:[#allocation2 + $0x4] sm:$0xf]
    %v51 = vld [vmem:[#allocation2 + $0x8] sm:$0xf]
    %v52 = vld [vmem:[#allocation2 + $0xc] sm:$0xf]
    %v53 = vld [vmem:[#allocation2 + $0x10] sm:$0xf]
    %v54 = vld [vmem:[#allocation2 + $0x14] sm:$0xf]
    %v55 = vld [vmem:[#allocation2 + $0x18] sm:$0xf]
    %v56 = vld [vmem:[#allocation2 + $0x1c] sm:$0xf]
    %v57 = vld [vmem:[#allocation2 + $0x20] sm:$0xf]
    %v58 = vld [vmem:[#allocation2 + $0x24] sm:$0xf]
    %v59 = vld [vmem:[#allocation2 + $0x28] sm:$0xf]
    %v60 = vld [vmem:[#allocation2 + $0x2c] sm:$0xf]
    %v61 = vld [vmem:[#allocation2 + $0x30] sm:$0xf]
    %v62 = vld [vmem:[#allocation2 + $0x34] sm:$0xf]
    %v63 = vld [vmem:[#allocation2 + $0x38] sm:$0xf]
    %v64 = vld [vmem:[#allocation2 + $0x3c] sm:$0xf]
    %v65 = vld [vmem:[#allocation2 + $0x40] sm:$0xf]
    %v66 = vld [vmem:[#allocation2 + $0x44] sm:$0xf]
    %v67 = vld [vmem:[#allocation2 + $0x48] sm:$0xf]
    %v68 = vld [vmem:[#allocation2 + $0x4c] sm:$0xf]
    %v69 = vld [vmem:[#allocation2 + $0x50] sm:$0xf]
    %v70 = vld [vmem:[#allocation2 + $0x54] sm:$0xf]
    %v71 = vld [vmem:[#allocation2 + $0x58] sm:$0xf]
    %v72 = vld [vmem:[#allocation2 + $0x5c] sm:$0xf]
    %v73 = vld [vmem:[#allocation2 + $0x60] sm:$0xf]
    %v74 = vld [vmem:[#allocation2 + $0x64] sm:$0xf]
    %v75 = vld [vmem:[#allocation2 + $0x68] sm:$0xf]
    %v76 = vld [vmem:[#allocation2 + $0x6c] sm:$0xf]
    %v77 = vld [vmem:[#allocation2 + $0x70] sm:$0xf]
    %v78 = vld [vmem:[#allocation2 + $0x74] sm:$0xf]
    %v79 = vld [vmem:[#allocation2 + $0x78] sm:$0xf]
    %v80 = vld [vmem:[#allocation2 + $0x7c] sm:$0xf]
    %v81 = vld [vmem:[#allocation2 + $0x80] sm:$0xf]
    %v82 = vld [vmem:[#allocation2 + $0x84] sm:$0xf]
    %v83 = vld [vmem:[#allocation2 + $0x88] sm:$0xf]
    %v84 = vld [vmem:[#allocation2 + $0x8c] sm:$0xf]
    %v85 = vld [vmem:[#allocation2 + $0x90] sm:$0xf]
    %v86 = vld [vmem:[#allocation2 + $0x94] sm:$0xf]
    %v87 = vld [vmem:[#allocation2 + $0x98] sm:$0xf]
    %v88 = vld [vmem:[#allocation2 + $0x9c] sm:$0xf]
    %v89 = vld [vmem:[#allocation2 + $0xa0] sm:$0xf]
    %v90 = vld [vmem:[#allocation2 + $0xa4] sm:$0xf]
    %v91 = vld [vmem:[#allocation2 + $0xa8] sm:$0xf]
    %v92 = vld [vmem:[#allocation2 + $0xac] sm:$0xf]
    %v93 = vld [vmem:[#allocation2 + $0xb0] sm:$0xf]
    %v94 = vld [vmem:[#allocation2 + $0xb4] sm:$0xf]
    %v95 = vld [vmem:[#allocation2 + $0xb8] sm:$0xf]
    %v96 = vld [vmem:[#allocation2 + $0xbc] sm:$0xf]
    %v97 = vld [vmem:[#allocation2 + $0xc0] sm:$0xf]
    %v98 = vld [vmem:[#allocation2 + $0xc4] sm:$0xf]
    %v99 = vld [vmem:[#allocation2 + $0xc8] sm:$0xf]
    %v100 = vld [vmem:[#allocation2 + $0xcc] sm:$0xf]
    %v101 = vld [vmem:[#allocation2 + $0xd0] sm:$0xf]
    %v102 = vld [vmem:[#allocation2 + $0xd4] sm:$0xf]
    %v103 = vld [vmem:[#allocation2 + $0xd8] sm:$0xf]
    %v104 = vld [vmem:[#allocation2 + $0xdc] sm:$0xf]
    %v105 = vld [vmem:[#allocation2 + $0xe0] sm:$0xf]
    %v106 = vld [vmem:[#allocation2 + $0xe4] sm:$0xf]
    %v107 = vld [vmem:[#allocation2 + $0xe8] sm:$0xf]
    %v108 = vld [vmem:[#allocation2 + $0xec] sm:$0xf]
    %v109 = vld [vmem:[#allocation2 + $0xf0] sm:$0xf]
    %v110 = vld [vmem:[#allocation2 + $0xf4] sm:$0xf]
    %v111 = vld [vmem:[#allocation2 + $0xf8] sm:$0xf]
    %v112 = vld [vmem:[#allocation2 + $0xfc] sm:$0xf]
    %v113 = vld [vmem:[#allocation2 + $0x100] sm:$0xf]
    %v114 = vld [vmem:[#allocation2 + $0x104] sm:$0xf]
    %v115 = vld [vmem:[#allocation2 + $0x108] sm:$0xf]
    %v116 = vld [vmem:[#allocation2 + $0x10c] sm:$0xf]
    %v117 = vld [vmem:[#allocation2 + $0x110] sm:$0xf]
    %v118 = vld [vmem:[#allocation2 + $0x114] sm:$0xf]
    %v119 = vld [vmem:[#allocation2 + $0x118] sm:$0xf]
    %v120 = vld [vmem:[#allocation2 + $0x11c] sm:$0xf]
    %v121 = vld [vmem:[#allocation2 + $0x120] sm:$0xf]
    %v122 = vld [vmem:[#allocation2 + $0x124] sm:$0xf]
    %v123 = vld [vmem:[#allocation2 + $0x128] sm:$0xf]
    %v124 = vld [vmem:[#allocation2 + $0x12c] sm:$0xf]
    %v125 = vld [vmem:[#allocation2 + $0x130] sm:$0xf]
    %v126 = vld [vmem:[#allocation2 + $0x134] sm:$0xf]
    %v127 = vld [vmem:[#allocation2 + $0x138] sm:$0xf]
    %v128 = vld [vmem:[#allocation2 + $0x13c] sm:$0xf]
    %v129 = vld [vmem:[#allocation2 + $0x140] sm:$0xf]
    %v130 = vld [vmem:[#allocation2 + $0x144] sm:$0xf]
    %v131 = vld [vmem:[#allocation2 + $0x148] sm:$0xf]
    %v132 = vld [vmem:[#allocation2 + $0x14c] sm:$0xf]
    %v133 = vld [vmem:[#allocation2 + $0x150] sm:$0xf]
    %v134 = vld [vmem:[#allocation2 + $0x154] sm:$0xf]
    %v135 = vld [vmem:[#allocation2 + $0x158] sm:$0xf]
    %v136 = vld [vmem:[#allocation2 + $0x15c] sm:$0xf]
    %v137 = vld [vmem:[#allocation2 + $0x160] sm:$0xf]
    %v138 = vld [vmem:[#allocation2 + $0x164] sm:$0xf]
    %v139 = vld [vmem:[#allocation2 + $0x168] sm:$0xf]
    %v140 = vld [vmem:[#allocation2 + $0x16c] sm:$0xf]
    %v141 = vld [vmem:[#allocation2 + $0x170] sm:$0xf]
    %v142 = vld [vmem:[#allocation2 + $0x174] sm:$0xf]
    %v143 = vld [vmem:[#allocation2 + $0x178] sm:$0xf]
    %v144 = vld [vmem:[#allocation2 + $0x17c] sm:$0xf]
    %v145 = vld [vmem:[#allocation2 + $0x180] sm:$0xf]
    %v146 = vld [vmem:[#allocation2 + $0x184] sm:$0xf]
    %v147 = vld [vmem:[#allocation2 + $0x188] sm:$0xf]
    %v148 = vld [vmem:[#allocation2 + $0x18c] sm:$0xf]
    %v149 = vld [vmem:[#allocation2 + $0x190] sm:$0xf]
    %v150 = vld [vmem:[#allocation2 + $0x194] sm:$0xf]
    %v151 = vld [vmem:[#allocation2 + $0x198] sm:$0xf]
    %v152 = vld [vmem:[#allocation2 + $0x19c] sm:$0xf]
    %v153 = vld [vmem:[#allocation2 + $0x1a0] sm:$0xf]
    %v154 = vld [vmem:[#allocation2 + $0x1a4] sm:$0xf]
    %v155 = vld [vmem:[#allocation2 + $0x1a8] sm:$0xf]
    %v156 = vld [vmem:[#allocation2 + $0x1ac] sm:$0xf]
    %v157 = vld [vmem:[#allocation2 + $0x1b0] sm:$0xf]
    %v158 = vld [vmem:[#allocation2 + $0x1b4] sm:$0xf]
    %v159 = vld [vmem:[#allocation2 + $0x1b8] sm:$0xf]
    %v160 = vld [vmem:[#allocation2 + $0x1bc] sm:$0xf]
    %v161 = vld [vmem:[#allocation2 + $0x1c0] sm:$0xf]
    %v162 = vld [vmem:[#allocation2 + $0x1c4] sm:$0xf]
    %v163 = vld [vmem:[#allocation2 + $0x1c8] sm:$0xf]
    %v164 = vld [vmem:[#allocation2 + $0x1cc] sm:$0xf]
    %v165 = vld [vmem:[#allocation2 + $0x1d0] sm:$0xf]
    %v166 = vld [vmem:[#allocation2 + $0x1d4] sm:$0xf]
    %v167 = vld [vmem:[#allocation2 + $0x1d8] sm:$0xf]
    %v168 = vld [vmem:[#allocation2 + $0x1dc] sm:$0xf]
    %v169 = vld [vmem:[#allocation2 + $0x1e0] sm:$0xf]
    %v170 = vld [vmem:[#allocation2 + $0x1e4] sm:$0xf]
    %v171 = vld [vmem:[#allocation2 + $0x1e8] sm:$0xf]
    %v172 = vld [vmem:[#allocation2 + $0x1ec] sm:$0xf]
    %v173 = vld [vmem:[#allocation2 + $0x1f0] sm:$0xf]
    %v174 = vld [vmem:[#allocation2 + $0x1f4] sm:$0xf]
    %v175 = vld [vmem:[#allocation2 + $0x1f8] sm:$0xf]
    %v176 = vld [vmem:[#allocation2 + $0x1fc] sm:$0xf]
    %v177 = vld [vmem:[#allocation2 + $0x200] sm:$0xf]
    %v178 = vld [vmem:[#allocation2 + $0x204] sm:$0xf]
    %v179 = vld [vmem:[#allocation2 + $0x208] sm:$0xf]
    %v180 = vld [vmem:[#allocation2 + $0x20c] sm:$0xf]
    %v181 = vld [vmem:[#allocation2 + $0x210] sm:$0xf]
    %v182 = vld [vmem:[#allocation2 + $0x214] sm:$0xf]
    %v183 = vld [vmem:[#allocation2 + $0x218] sm:$0xf]
    %v184 = vld [vmem:[#allocation2 + $0x21c] sm:$0xf]
    %v185 = vld [vmem:[#allocation2 + $0x220] sm:$0xf]
    %v186 = vld [vmem:[#allocation2 + $0x224] sm:$0xf]
    %v187 = vld [vmem:[#allocation2 + $0x228] sm:$0xf]
    %v188 = vld [vmem:[#allocation2 + $0x22c] sm:$0xf]
    %v189 = vld [vmem:[#allocation2 + $0x230] sm:$0xf]
    %v190 = vld [vmem:[#allocation2 + $0x234] sm:$0xf]
    %v191 = vld [vmem:[#allocation2 + $0x238] sm:$0xf]
    %v192 = vld [vmem:[#allocation2 + $0x23c] sm:$0xf]
    %v193 = vld [vmem:[#allocation2 + $0x240] sm:$0xf]
    %v194 = vld [vmem:[#allocation2 + $0x244] sm:$0xf]
    %v195 = vld [vmem:[#allocation2 + $0x248] sm:$0xf]
    %v196 = vld [vmem:[#allocation2 + $0x24c] sm:$0xf]
    %v197 = vld [vmem:[#allocation2 + $0x250] sm:$0xf]
    %v198 = vld [vmem:[#allocation2 + $0x254] sm:$0xf]
    %v199 = vld [vmem:[#allocation2 + $0x258] sm:$0xf]
    %v200 = vld [vmem:[#allocation2 + $0x25c] sm:$0xf]
    %v201 = vld [vmem:[#allocation2 + $0x260] sm:$0xf]
    %v202 = vld [vmem:[#allocation2 + $0x264] sm:$0xf]
    %v203 = vld [vmem:[#allocation2 + $0x268] sm:$0xf]
    %v204 = vld [vmem:[#allocation2 + $0x26c] sm:$0xf]
    %v205 = vld [vmem:[#allocation2 + $0x270] sm:$0xf]
    %v206 = vld [vmem:[#allocation2 + $0x274] sm:$0xf]
    %v207 = vld [vmem:[#allocation2 + $0x278] sm:$0xf]
    %v208 = vld [vmem:[#allocation2 + $0x27c] sm:$0xf]
    %v209 = vld [vmem:[#allocation2 + $0x280] sm:$0xf]
    %v210 = vld [vmem:[#allocation2 + $0x284] sm:$0xf]
    %v211 = vld [vmem:[#allocation2 + $0x288] sm:$0xf]
    %v212 = vld [vmem:[#allocation2 + $0x28c] sm:$0xf]
    %v213 = vld [vmem:[#allocation2 + $0x290] sm:$0xf]
    %v214 = vld [vmem:[#allocation2 + $0x294] sm:$0xf]
    %v215 = vld [vmem:[#allocation2 + $0x298] sm:$0xf]
    %v216 = vld [vmem:[#allocation2 + $0x29c] sm:$0xf]
    %v217 = vld [vmem:[#allocation2 + $0x2a0] sm:$0xf]
    %v218 = vld [vmem:[#allocation2 + $0x2a4] sm:$0xf]
    %v219 = vld [vmem:[#allocation2 + $0x2a8] sm:$0xf]
    %v220 = vld [vmem:[#allocation2 + $0x2ac] sm:$0xf]
    %v221 = vld [vmem:[#allocation2 + $0x2b0] sm:$0xf]
    %v222 = vld [vmem:[#allocation2 + $0x2b4] sm:$0xf]
    %v223 = vld [vmem:[#allocation2 + $0x2b8] sm:$0xf]
    %v224 = vld [vmem:[#allocation2 + $0x2bc] sm:$0xf]
    %v225 = vld [vmem:[#allocation2 + $0x2c0] sm:$0xf]
    %v226 = vld [vmem:[#allocation2 + $0x2c4] sm:$0xf]
    %v227 = vld [vmem:[#allocation2 + $0x2c8] sm:$0xf]
    %v228 = vld [vmem:[#allocation2 + $0x2cc] sm:$0xf]
    %v229 = vld [vmem:[#allocation2 + $0x2d0] sm:$0xf]
    %v230 = vld [vmem:[#allocation2 + $0x2d4] sm:$0xf]
    %v231 = vld [vmem:[#allocation2 + $0x2d8] sm:$0xf]
    %v232 = vld [vmem:[#allocation2 + $0x2dc] sm:$0xf]
    %v233 = vld [vmem:[#allocation2 + $0x2e0] sm:$0xf]
    %v234 = vld [vmem:[#allocation2 + $0x2e4] sm:$0xf]
    %v235 = vld [vmem:[#allocation2 + $0x2e8] sm:$0xf]
    %v236 = vld [vmem:[#allocation2 + $0x2ec] sm:$0xf]
    %v237 = vld [vmem:[#allocation2 + $0x2f0] sm:$0xf]
    %v238 = vld [vmem:[#allocation2 + $0x2f4] sm:$0xf]
    %v239 = vld [vmem:[#allocation2 + $0x2f8] sm:$0xf]
    %v240 = vld [vmem:[#allocation2 + $0x2fc] sm:$0xf]
    %v241 = vld [vmem:[%s2] sm:$0x1]
    %v243 = vperm.slane %v241, 0
    %v251 = vunpack.c.l.b16 %v43
    %v252 = vunpack.c.h.b16 %v43
    %v253 = vunpack.c.l.b16 %v44
    %v254 = vunpack.c.h.b16 %v44
    %v255 = vunpack.c.l.b16 %v45
    %v256 = vunpack.c.h.b16 %v45
    %v257 = vunpack.c.l.b16 %v46
    %v258 = vunpack.c.h.b16 %v46
    %v259 = vunpack.c.l.b16 %v47
    %v260 = vunpack.c.h.b16 %v47
    %v261 = vunpack.c.l.b16 %v48
    %v262 = vunpack.c.h.b16 %v48
    %v263 = vpack.c.b16 %v251, %v251
    %v264 = vpack.c.b16 %v252, %v252
    %v265 = vpack.c.b16 %v253, %v253
    %v266 = vpack.c.b16 %v254, %v254
    %v267 = vpack.c.b16 %v255, %v255
    %v268 = vpack.c.b16 %v256, %v256
    %v269 = vpack.c.b16 %v257, %v257
    %v270 = vpack.c.b16 %v258, %v258
    %v271 = vpack.c.b16 %v259, %v259
    %v272 = vpack.c.b16 %v260, %v260
    %v273 = vpack.c.b16 %v261, %v261
    %v274 = vpack.c.b16 %v262, %v262
    %v479 = vunpack.c.l.b16 %v49
    %v480 = vunpack.c.l.b16 %v50
    %v481 = vunpack.c.l.b16 %v51
    %v482 = vunpack.c.l.b16 %v52
    %v483 = vunpack.c.l.b16 %v53
    %v484 = vunpack.c.l.b16 %v54
    %v485 = vunpack.c.l.b16 %v55
    %v486 = vunpack.c.l.b16 %v56
    %v487 = vunpack.c.l.b16 %v57
    %v488 = vunpack.c.l.b16 %v58
    %v489 = vunpack.c.l.b16 %v59
    %v490 = vunpack.c.l.b16 %v60
    %v491 = vunpack.c.l.b16 %v61
    %v492 = vunpack.c.l.b16 %v62
    %v493 = vunpack.c.l.b16 %v63
    %v494 = vunpack.c.l.b16 %v64
    %v495 = vunpack.c.l.b16 %v65
    %v496 = vunpack.c.l.b16 %v66
    %v497 = vunpack.c.l.b16 %v67
    %v498 = vunpack.c.l.b16 %v68
    %v499 = vunpack.c.l.b16 %v69
    %v500 = vunpack.c.l.b16 %v70
    %v501 = vunpack.c.l.b16 %v71
    %v502 = vunpack.c.l.b16 %v72
    %v503 = vunpack.c.l.b16 %v73
    %v504 = vunpack.c.l.b16 %v74
    %v505 = vunpack.c.l.b16 %v75
    %v506 = vunpack.c.l.b16 %v76
    %v507 = vunpack.c.l.b16 %v77
    %v508 = vunpack.c.l.b16 %v78
    %v509 = vunpack.c.l.b16 %v79
    %v510 = vunpack.c.l.b16 %v80
    %v511 = vunpack.c.l.b16 %v81
    %v512 = vunpack.c.l.b16 %v82
    %v513 = vunpack.c.l.b16 %v83
    %v514 = vunpack.c.l.b16 %v84
    %v515 = vunpack.c.l.b16 %v85
    %v516 = vunpack.c.l.b16 %v86
    %v517 = vunpack.c.l.b16 %v87
    %v518 = vunpack.c.l.b16 %v88
    %v519 = vunpack.c.l.b16 %v89
    %v520 = vunpack.c.l.b16 %v90
    %v521 = vunpack.c.l.b16 %v91
    %v522 = vunpack.c.l.b16 %v92
    %v523 = vunpack.c.l.b16 %v93
    %v524 = vunpack.c.l.b16 %v94
    %v525 = vunpack.c.l.b16 %v95
    %v526 = vunpack.c.l.b16 %v96
    %v527 = vunpack.c.l.b16 %v97
    %v528 = vunpack.c.l.b16 %v98
    %v529 = vunpack.c.l.b16 %v99
    %v530 = vunpack.c.l.b16 %v100
    %v531 = vunpack.c.l.b16 %v101
    %v532 = vunpack.c.l.b16 %v102
    %v533 = vunpack.c.l.b16 %v103
    %v534 = vunpack.c.l.b16 %v104
    %v535 = vunpack.c.l.b16 %v105
    %v536 = vunpack.c.l.b16 %v106
    %v537 = vunpack.c.l.b16 %v107
    %v538 = vunpack.c.l.b16 %v108
    %v539 = vunpack.c.l.b16 %v109
    %v540 = vunpack.c.l.b16 %v110
    %v541 = vunpack.c.l.b16 %v111
    %v542 = vunpack.c.l.b16 %v112
    %v543 = vunpack.c.l.b16 %v113
    %v544 = vunpack.c.l.b16 %v114
    %v545 = vunpack.c.l.b16 %v115
    %v546 = vunpack.c.l.b16 %v116
    %v547 = vunpack.c.l.b16 %v117
    %v548 = vunpack.c.l.b16 %v118
    %v549 = vunpack.c.l.b16 %v119
    %v550 = vunpack.c.l.b16 %v120
    %v551 = vunpack.c.l.b16 %v121
    %v552 = vunpack.c.l.b16 %v122
    %v553 = vunpack.c.l.b16 %v123
    %v554 = vunpack.c.l.b16 %v124
    %v555 = vunpack.c.l.b16 %v125
    %v556 = vunpack.c.l.b16 %v126
    %v557 = vunpack.c.l.b16 %v127
    %v558 = vunpack.c.l.b16 %v128
    %v559 = vunpack.c.l.b16 %v129
    %v560 = vunpack.c.l.b16 %v130
    %v561 = vunpack.c.l.b16 %v131
    %v562 = vunpack.c.l.b16 %v132
    %v563 = vunpack.c.l.b16 %v133
    %v564 = vunpack.c.l.b16 %v134
    %v565 = vunpack.c.l.b16 %v135
    %v566 = vunpack.c.l.b16 %v136
    %v567 = vunpack.c.l.b16 %v137
    %v568 = vunpack.c.l.b16 %v138
    %v569 = vunpack.c.l.b16 %v139
    %v570 = vunpack.c.l.b16 %v140
    %v571 = vunpack.c.l.b16 %v141
    %v572 = vunpack.c.l.b16 %v142
    %v573 = vunpack.c.l.b16 %v143
    %v574 = vunpack.c.l.b16 %v144
    %v575 = vunpack.c.l.b16 %v145
    %v576 = vunpack.c.l.b16 %v146
    %v577 = vunpack.c.l.b16 %v147
    %v578 = vunpack.c.l.b16 %v148
    %v579 = vunpack.c.l.b16 %v149
    %v580 = vunpack.c.l.b16 %v150
    %v581 = vunpack.c.l.b16 %v151
    %v582 = vunpack.c.l.b16 %v152
    %v583 = vunpack.c.l.b16 %v153
    %v584 = vunpack.c.l.b16 %v154
    %v585 = vunpack.c.l.b16 %v155
    %v586 = vunpack.c.l.b16 %v156
    %v587 = vunpack.c.l.b16 %v157
    %v588 = vunpack.c.l.b16 %v158
    %v589 = vunpack.c.l.b16 %v159
    %v590 = vunpack.c.l.b16 %v160
    %v591 = vunpack.c.l.b16 %v161
    %v592 = vunpack.c.l.b16 %v162
    %v593 = vunpack.c.l.b16 %v163
    %v594 = vunpack.c.l.b16 %v164
    %v595 = vunpack.c.l.b16 %v165
    %v596 = vunpack.c.l.b16 %v166
    %v597 = vunpack.c.l.b16 %v167
    %v598 = vunpack.c.l.b16 %v168
    %v599 = vunpack.c.l.b16 %v169
    %v600 = vunpack.c.l.b16 %v170
    %v601 = vunpack.c.l.b16 %v171
    %v602 = vunpack.c.l.b16 %v172
    %v603 = vunpack.c.l.b16 %v173
    %v604 = vunpack.c.l.b16 %v174
    %v605 = vunpack.c.l.b16 %v175
    %v606 = vunpack.c.l.b16 %v176
    %v607 = vunpack.c.l.b16 %v177
    %v608 = vunpack.c.l.b16 %v178
    %v609 = vunpack.c.l.b16 %v179
    %v610 = vunpack.c.l.b16 %v180
    %v611 = vunpack.c.l.b16 %v181
    %v612 = vunpack.c.l.b16 %v182
    %v613 = vunpack.c.l.b16 %v183
    %v614 = vunpack.c.l.b16 %v184
    %v615 = vunpack.c.l.b16 %v185
    %v616 = vunpack.c.l.b16 %v186
    %v617 = vunpack.c.l.b16 %v187
    %v618 = vunpack.c.l.b16 %v188
    %v619 = vunpack.c.l.b16 %v189
    %v620 = vunpack.c.l.b16 %v190
    %v621 = vunpack.c.l.b16 %v191
    %v622 = vunpack.c.l.b16 %v192
    %v623 = vunpack.c.l.b16 %v193
    %v624 = vunpack.c.l.b16 %v194
    %v625 = vunpack.c.l.b16 %v195
    %v626 = vunpack.c.l.b16 %v196
    %v627 = vunpack.c.l.b16 %v197
    %v628 = vunpack.c.l.b16 %v198
    %v629 = vunpack.c.l.b16 %v199
    %v630 = vunpack.c.l.b16 %v200
    %v631 = vunpack.c.l.b16 %v201
    %v632 = vunpack.c.l.b16 %v202
    %v633 = vunpack.c.l.b16 %v203
    %v634 = vunpack.c.l.b16 %v204
    %v635 = vunpack.c.l.b16 %v205
    %v636 = vunpack.c.l.b16 %v206
    %v637 = vunpack.c.l.b16 %v207
    %v638 = vunpack.c.l.b16 %v208
    %v639 = vunpack.c.l.b16 %v209
    %v640 = vunpack.c.l.b16 %v210
    %v641 = vunpack.c.l.b16 %v211
    %v642 = vunpack.c.l.b16 %v212
    %v643 = vunpack.c.l.b16 %v213
    %v644 = vunpack.c.l.b16 %v214
    %v645 = vunpack.c.l.b16 %v215
    %v646 = vunpack.c.l.b16 %v216
    %v647 = vunpack.c.l.b16 %v217
    %v648 = vunpack.c.l.b16 %v218
    %v649 = vunpack.c.l.b16 %v219
    %v650 = vunpack.c.l.b16 %v220
    %v651 = vunpack.c.l.b16 %v221
    %v652 = vunpack.c.l.b16 %v222
    %v653 = vunpack.c.l.b16 %v223
    %v654 = vunpack.c.l.b16 %v224
    %v655 = vunpack.c.l.b16 %v225
    %v656 = vunpack.c.l.b16 %v226
    %v657 = vunpack.c.l.b16 %v227
    %v658 = vunpack.c.l.b16 %v228
    %v659 = vunpack.c.l.b16 %v229
    %v660 = vunpack.c.l.b16 %v230
    %v661 = vunpack.c.l.b16 %v231
    %v662 = vunpack.c.l.b16 %v232
    %v663 = vunpack.c.l.b16 %v233
    %v664 = vunpack.c.l.b16 %v234
    %v665 = vunpack.c.l.b16 %v235
    %v666 = vunpack.c.l.b16 %v236
    %v667 = vunpack.c.l.b16 %v237
    %v668 = vunpack.c.l.b16 %v238
    %v669 = vunpack.c.l.b16 %v239
    %v670 = vunpack.c.l.b16 %v240
    %v671 = vpack.c.b16 %v480, %v479
    %v672 = vpack.c.b16 %v482, %v481
    %v673 = vpack.c.b16 %v484, %v483
    %v674 = vpack.c.b16 %v486, %v485
    %v675 = vpack.c.b16 %v488, %v487
    %v676 = vpack.c.b16 %v490, %v489
    %v677 = vpack.c.b16 %v492, %v491
    %v678 = vpack.c.b16 %v494, %v493
    %v679 = vpack.c.b16 %v496, %v495
    %v680 = vpack.c.b16 %v498, %v497
    %v681 = vpack.c.b16 %v500, %v499
    %v682 = vpack.c.b16 %v502, %v501
    %v683 = vpack.c.b16 %v504, %v503
    %v684 = vpack.c.b16 %v506, %v505
    %v685 = vpack.c.b16 %v508, %v507
    %v686 = vpack.c.b16 %v510, %v509
    %v687 = vpack.c.b16 %v512, %v511
    %v688 = vpack.c.b16 %v514, %v513
    %v689 = vpack.c.b16 %v516, %v515
    %v690 = vpack.c.b16 %v518, %v517
    %v691 = vpack.c.b16 %v520, %v519
    %v692 = vpack.c.b16 %v522, %v521
    %v693 = vpack.c.b16 %v524, %v523
    %v694 = vpack.c.b16 %v526, %v525
    %v695 = vpack.c.b16 %v528, %v527
    %v696 = vpack.c.b16 %v530, %v529
    %v697 = vpack.c.b16 %v532, %v531
    %v698 = vpack.c.b16 %v534, %v533
    %v699 = vpack.c.b16 %v536, %v535
    %v700 = vpack.c.b16 %v538, %v537
    %v701 = vpack.c.b16 %v540, %v539
    %v702 = vpack.c.b16 %v542, %v541
    %v703 = vpack.c.b16 %v544, %v543
    %v704 = vpack.c.b16 %v546, %v545
    %v705 = vpack.c.b16 %v548, %v547
    %v706 = vpack.c.b16 %v550, %v549
    %v707 = vpack.c.b16 %v552, %v551
    %v708 = vpack.c.b16 %v554, %v553
    %v709 = vpack.c.b16 %v556, %v555
    %v710 = vpack.c.b16 %v558, %v557
    %v711 = vpack.c.b16 %v560, %v559
    %v712 = vpack.c.b16 %v562, %v561
    %v713 = vpack.c.b16 %v564, %v563
    %v714 = vpack.c.b16 %v566, %v565
    %v715 = vpack.c.b16 %v568, %v567
    %v716 = vpack.c.b16 %v570, %v569
    %v717 = vpack.c.b16 %v572, %v571
    %v718 = vpack.c.b16 %v574, %v573
    %v719 = vpack.c.b16 %v576, %v575
    %v720 = vpack.c.b16 %v578, %v577
    %v721 = vpack.c.b16 %v580, %v579
    %v722 = vpack.c.b16 %v582, %v581
    %v723 = vpack.c.b16 %v584, %v583
    %v724 = vpack.c.b16 %v586, %v585
    %v725 = vpack.c.b16 %v588, %v587
    %v726 = vpack.c.b16 %v590, %v589
    %v727 = vpack.c.b16 %v592, %v591
    %v728 = vpack.c.b16 %v594, %v593
    %v729 = vpack.c.b16 %v596, %v595
    %v730 = vpack.c.b16 %v598, %v597
    %v731 = vpack.c.b16 %v600, %v599
    %v732 = vpack.c.b16 %v602, %v601
    %v733 = vpack.c.b16 %v604, %v603
    %v734 = vpack.c.b16 %v606, %v605
    %v735 = vpack.c.b16 %v608, %v607
    %v736 = vpack.c.b16 %v610, %v609
    %v737 = vpack.c.b16 %v612, %v611
    %v738 = vpack.c.b16 %v614, %v613
    %v739 = vpack.c.b16 %v616, %v615
    %v740 = vpack.c.b16 %v618, %v617
    %v741 = vpack.c.b16 %v620, %v619
    %v742 = vpack.c.b16 %v622, %v621
    %v743 = vpack.c.b16 %v624, %v623
    %v744 = vpack.c.b16 %v626, %v625
    %v745 = vpack.c.b16 %v628, %v627
    %v746 = vpack.c.b16 %v630, %v629
    %v747 = vpack.c.b16 %v632, %v631
    %v748 = vpack.c.b16 %v634, %v633
    %v749 = vpack.c.b16 %v636, %v635
    %v750 = vpack.c.b16 %v638, %v637
    %v751 = vpack.c.b16 %v640, %v639
    %v752 = vpack.c.b16 %v642, %v641
    %v753 = vpack.c.b16 %v644, %v643
    %v754 = vpack.c.b16 %v646, %v645
    %v755 = vpack.c.b16 %v648, %v647
    %v756 = vpack.c.b16 %v650, %v649
    %v757 = vpack.c.b16 %v652, %v651
    %v758 = vpack.c.b16 %v654, %v653
    %v759 = vpack.c.b16 %v656, %v655
    %v760 = vpack.c.b16 %v658, %v657
    %v761 = vpack.c.b16 %v660, %v659
    %v762 = vpack.c.b16 %v662, %v661
    %v763 = vpack.c.b16 %v664, %v663
    %v764 = vpack.c.b16 %v666, %v665
    %v765 = vpack.c.b16 %v668, %v667
    %v766 = vpack.c.b16 %v670, %v669
    %863 = vmatpush.bf16.msra.mxu0 %v678
    %864 = vmatpush.bf16.msra.mxu0 %v677
    %865 = vmatpush.bf16.msra.mxu0 %v676
    %866 = vmatpush.bf16.msra.mxu0 %v675
    %867 = vmatpush.bf16.msra.mxu0 %v674
    %868 = vmatpush.bf16.msra.mxu0 %v673
    %869 = vmatpush.bf16.msra.mxu0 %v672
    %870 = vmatpush.bf16.msra.mxu0 %v671
    %871 = vmatmul.bf16.gmra.mxu0 %v263
    %v872 = vpop.f32.mrf.mxu0
    %v873 = vadd.f32 %v243, %v872
    %v874 = vpop.f32.mrf.mxu0
    %875 = vdwg.mxu0
    %876 = vmatpush.bf16.msra.mxu0 %v686
    %877 = vmatpush.bf16.msra.mxu0 %v685
    %878 = vmatpush.bf16.msra.mxu0 %v684
    %879 = vmatpush.bf16.msra.mxu0 %v683
    %880 = vmatpush.bf16.msra.mxu0 %v682
    %881 = vmatpush.bf16.msra.mxu0 %v681
    %882 = vmatpush.bf16.msra.mxu0 %v680
    %883 = vmatpush.bf16.msra.mxu0 %v679
    %884 = vmatmul.bf16.gmra.mxu0 %v264
    %v885 = vpop.f32.mrf.mxu0
    %v886 = vadd.f32 %v873, %v885
    %v887 = vpop.f32.mrf.mxu0
    %888 = vdwg.mxu0
    %889 = vmatpush.bf16.msra.mxu0 %v694
    %890 = vmatpush.bf16.msra.mxu0 %v693
    %891 = vmatpush.bf16.msra.mxu0 %v692
    %892 = vmatpush.bf16.msra.mxu0 %v691
    %893 = vmatpush.bf16.msra.mxu0 %v690
    %894 = vmatpush.bf16.msra.mxu0 %v689
    %895 = vmatpush.bf16.msra.mxu0 %v688
    %896 = vmatpush.bf16.msra.mxu0 %v687
    %897 = vmatmul.bf16.gmra.mxu0 %v265
    %v898 = vpop.f32.mrf.mxu0
    %v899 = vadd.f32 %v886, %v898
    %v900 = vpop.f32.mrf.mxu0
    %901 = vdwg.mxu0
    %902 = vmatpush.bf16.msra.mxu0 %v702
    %903 = vmatpush.bf16.msra.mxu0 %v701
    %904 = vmatpush.bf16.msra.mxu0 %v700
    %905 = vmatpush.bf16.msra.mxu0 %v699
    %906 = vmatpush.bf16.msra.mxu0 %v698
    %907 = vmatpush.bf16.msra.mxu0 %v697
    %908 = vmatpush.bf16.msra.mxu0 %v696
    %909 = vmatpush.bf16.msra.mxu0 %v695
    %910 = vmatmul.bf16.gmra.mxu0 %v266
    %v911 = vpop.f32.mrf.mxu0
    %v912 = vadd.f32 %v899, %v911
    %v913 = vpop.f32.mrf.mxu0
    %914 = vdwg.mxu0
    %915 = vmatpush.bf16.msra.mxu0 %v710
    %916 = vmatpush.bf16.msra.mxu0 %v709
    %917 = vmatpush.bf16.msra.mxu0 %v708
    %918 = vmatpush.bf16.msra.mxu0 %v707
    %919 = vmatpush.bf16.msra.mxu0 %v706
    %920 = vmatpush.bf16.msra.mxu0 %v705
    %921 = vmatpush.bf16.msra.mxu0 %v704
    %922 = vmatpush.bf16.msra.mxu0 %v703
    %923 = vmatmul.bf16.gmra.mxu0 %v267
    %v924 = vpop.f32.mrf.mxu0
    %v925 = vadd.f32 %v912, %v924
    %v926 = vpop.f32.mrf.mxu0
    %927 = vdwg.mxu0
    %928 = vmatpush.bf16.msra.mxu0 %v718
    %929 = vmatpush.bf16.msra.mxu0 %v717
    %930 = vmatpush.bf16.msra.mxu0 %v716
    %931 = vmatpush.bf16.msra.mxu0 %v715
    %932 = vmatpush.bf16.msra.mxu0 %v714
    %933 = vmatpush.bf16.msra.mxu0 %v713
    %934 = vmatpush.bf16.msra.mxu0 %v712
    %935 = vmatpush.bf16.msra.mxu0 %v711
    %936 = vmatmul.bf16.gmra.mxu0 %v268
    %v937 = vpop.f32.mrf.mxu0
    %v938 = vadd.f32 %v925, %v937
    %v939 = vpop.f32.mrf.mxu0
    %940 = vdwg.mxu0
    %941 = vmatpush.bf16.msra.mxu0 %v726
    %942 = vmatpush.bf16.msra.mxu0 %v725
    %943 = vmatpush.bf16.msra.mxu0 %v724
    %944 = vmatpush.bf16.msra.mxu0 %v723
    %945 = vmatpush.bf16.msra.mxu0 %v722
    %946 = vmatpush.bf16.msra.mxu0 %v721
    %947 = vmatpush.bf16.msra.mxu0 %v720
    %948 = vmatpush.bf16.msra.mxu0 %v719
    %949 = vmatmul.bf16.gmra.mxu0 %v269
    %v950 = vpop.f32.mrf.mxu0
    %v951 = vadd.f32 %v938, %v950
    %v952 = vpop.f32.mrf.mxu0
    %953 = vdwg.mxu0
    %954 = vmatpush.bf16.msra.mxu0 %v734
    %955 = vmatpush.bf16.msra.mxu0 %v733
    %956 = vmatpush.bf16.msra.mxu0 %v732
    %957 = vmatpush.bf16.msra.mxu0 %v731
    %958 = vmatpush.bf16.msra.mxu0 %v730
    %959 = vmatpush.bf16.msra.mxu0 %v729
    %960 = vmatpush.bf16.msra.mxu0 %v728
    %961 = vmatpush.bf16.msra.mxu0 %v727
    %962 = vmatmul.bf16.gmra.mxu0 %v270
    %v963 = vpop.f32.mrf.mxu0
    %v964 = vadd.f32 %v951, %v963
    %v965 = vpop.f32.mrf.mxu0
    %966 = vdwg.mxu0
    %967 = vmatpush.bf16.msra.mxu0 %v742
    %968 = vmatpush.bf16.msra.mxu0 %v741
    %969 = vmatpush.bf16.msra.mxu0 %v740
    %970 = vmatpush.bf16.msra.mxu0 %v739
    %971 = vmatpush.bf16.msra.mxu0 %v738
    %972 = vmatpush.bf16.msra.mxu0 %v737
    %973 = vmatpush.bf16.msra.mxu0 %v736
    %974 = vmatpush.bf16.msra.mxu0 %v735
    %975 = vmatmul.bf16.gmra.mxu0 %v271
    %v976 = vpop.f32.mrf.mxu0
    %v977 = vadd.f32 %v964, %v976
    %v978 = vpop.f32.mrf.mxu0
    %979 = vdwg.mxu0
    %980 = vmatpush.bf16.msra.mxu0 %v750
    %981 = vmatpush.bf16.msra.mxu0 %v749
    %982 = vmatpush.bf16.msra.mxu0 %v748
    %983 = vmatpush.bf16.msra.mxu0 %v747
    %984 = vmatpush.bf16.msra.mxu0 %v746
    %985 = vmatpush.bf16.msra.mxu0 %v745
    %986 = vmatpush.bf16.msra.mxu0 %v744
    %987 = vmatpush.bf16.msra.mxu0 %v743
    %988 = vmatmul.bf16.gmra.mxu0 %v272
    %v989 = vpop.f32.mrf.mxu0
    %v990 = vadd.f32 %v977, %v989
    %v991 = vpop.f32.mrf.mxu0
    %992 = vdwg.mxu0
    %993 = vmatpush.bf16.msra.mxu0 %v758
    %994 = vmatpush.bf16.msra.mxu0 %v757
    %995 = vmatpush.bf16.msra.mxu0 %v756
    %996 = vmatpush.bf16.msra.mxu0 %v755
    %997 = vmatpush.bf16.msra.mxu0 %v754
    %998 = vmatpush.bf16.msra.mxu0 %v753
    %999 = vmatpush.bf16.msra.mxu0 %v752
    %1000 = vmatpush.bf16.msra.mxu0 %v751
    %1001 = vmatmul.bf16.gmra.mxu0 %v273
    %v1002 = vpop.f32.mrf.mxu0
    %v1003 = vadd.f32 %v990, %v1002
    %v1004 = vpop.f32.mrf.mxu0
    %1005 = vdwg.mxu0
    %1006 = vmatpush.bf16.msra.mxu0 %v766
    %1007 = vmatpush.bf16.msra.mxu0 %v765
    %1008 = vmatpush.bf16.msra.mxu0 %v764
    %1009 = vmatpush.bf16.msra.mxu0 %v763
    %1010 = vmatpush.bf16.msra.mxu0 %v762
    %1011 = vmatpush.bf16.msra.mxu0 %v761
    %1012 = vmatpush.bf16.msra.mxu0 %v760
    %1013 = vmatpush.bf16.msra.mxu0 %v759
    %1014 = vmatmul.bf16.gmra.mxu0 %v274
    %v1015 = vpop.f32.mrf.mxu0
    %v1016 = vadd.f32 %v1003, %v1015
    %v1017 = vpop.f32.mrf.mxu0
    %1018 = vdwg.mxu0
    %v1019 = vmax.f32 %v1016, 0.0
    %v1020 = vld [vmem:[%s3] sm:$0xff]
    %v1021 = vld [vmem:[%s3 + $0x8] sm:$0xff]
    %v1022 = vld [vmem:[%s3 + $0x10] sm:$0xff]
    %v1023 = vld [vmem:[%s3 + $0x18] sm:$0xff]
    %v1024 = vld [vmem:[%s3 + $0x20] sm:$0xff]
    %v1025 = vld [vmem:[%s3 + $0x28] sm:$0xff]
    %v1026 = vld [vmem:[%s3 + $0x30] sm:$0xff]
    %v1027 = vld [vmem:[%s3 + $0x38] sm:$0xff]
    %v1028 = vld [vmem:[%s3 + $0x40] sm:$0xff]
    %v1029 = vld [vmem:[%s3 + $0x48] sm:$0xff]
    %v1030 = vld [vmem:[%s3 + $0x50] sm:$0xff]
    %v1031 = vld [vmem:[%s3 + $0x58] sm:$0xff]
    %v1032 = vld [vmem:[%s3 + $0x60] sm:$0xff]
    %v1033 = vld [vmem:[%s3 + $0x68] sm:$0xff]
    %v1034 = vld [vmem:[%s3 + $0x70] sm:$0xff]
    %v1035 = vld [vmem:[%s3 + $0x78] sm:$0xff]
    %v1036 = vld [vmem:[%s4] sm:$0x1]
    %v1038 = vperm.slane %v1036, 0
    %1040 = vmatpush.msra.mxu0 %v1035
    %1041 = vmatpush.msra.mxu0 %v1034
    %1042 = vmatpush.msra.mxu0 %v1033
    %1043 = vmatpush.msra.mxu0 %v1032
    %1044 = vmatpush.msra.mxu0 %v1031
    %1045 = vmatpush.msra.mxu0 %v1030
    %1046 = vmatpush.msra.mxu0 %v1029
    %1047 = vmatpush.msra.mxu0 %v1028
    %1048 = vmatpush.msra.mxu0 %v1027
    %1049 = vmatpush.msra.mxu0 %v1026
    %1050 = vmatpush.msra.mxu0 %v1025
    %1051 = vmatpush.msra.mxu0 %v1024
    %1052 = vmatpush.msra.mxu0 %v1023
    %1053 = vmatpush.msra.mxu0 %v1022
    %1054 = vmatpush.msra.mxu0 %v1021
    %1055 = vmatpush.msra.mxu0 %v1020
    %1056 = vmatmul.f32.gmra.mxu0 %v1019
    %v1057 = vpop.f32.mrf.mxu0
    %v1058 = vadd.f32 %v1038, %v1057
    %1059 = vdwg.mxu0
    %v1060 = vmax.f32 %v1058, 0.0
    %v1061 = vld [vmem:[%s5] sm:$0xff]
    %v1062 = vld [vmem:[%s5 + $0x8] sm:$0xff]
    %v1063 = vld [vmem:[%s5 + $0x10] sm:$0xff]
    %v1064 = vld [vmem:[%s5 + $0x18] sm:$0xff]
    %v1065 = vld [vmem:[%s6] sm:$0x1]
    %v1067 = vperm.slane %v1065, 0
    %vm1069 = vcmask 261120
    %v1071 = vsel %vm1069, %v1060, 0
    %1073 = vmatpush.msra.mxu0 0.0
    %1074 = vmatpush.msra.mxu0 0.0
    %1075 = vmatpush.msra.mxu0 0.0
    %1076 = vmatpush.msra.mxu0 0.0
    %1077 = vmatpush.msra.mxu0 0.0
    %1078 = vmatpush.msra.mxu0 0.0
    %1079 = vmatpush.msra.mxu0 0.0
    %1080 = vmatpush.msra.mxu0 0.0
    %1081 = vmatpush.msra.mxu0 0.0
    %1082 = vmatpush.msra.mxu0 0.0
    %1083 = vmatpush.msra.mxu0 0.0
    %1084 = vmatpush.msra.mxu0 0.0
    %1085 = vmatpush.msra.mxu0 %v1064
    %1086 = vmatpush.msra.mxu0 %v1063
    %1087 = vmatpush.msra.mxu0 %v1062
    %1088 = vmatpush.msra.mxu0 %v1061
    %1089 = vmatmul.f32.gmra.mxu0 %v1071
    %v1090 = vpop.f32.mrf.mxu0
    %v1091 = vadd.f32 %v1067, %v1090
    %1092 = vdwg.mxu0
    %1093 = vst [vmem:[#allocation5] sm:$0xff] %v1091
    // Predicated region
    $region34: #{tpu_custom_call.1} parent=1 // pred_check
      _
    $region35: #{tpu_custom_call.1} parent=1 // pred_check_branch
      %1095 = sbr.rel (0) target = $region37
    $region36: #{tpu_custom_call.1} parent=1 // pred_region
      %1097 = vsyncadd [#allocation4], 0
      %s1099 = sshll.u32 [#allocation5], 4
      %s1100 = int_to_ptr.vmem [resolvable:$true] %s1099
      %s1101 = sshll.u32 %s7, 4
      %s1102 = int_to_ptr.hbm [resolvable:$true] %s1101
      %1104 = dma.vmem_to_hbm [thread:$0]  %s1100, 128, %s1102, [#allocation4]
    $region37: #{tpu_custom_call.1} parent=1 // pred_fallthru
      _
    // Predicated region
    $region38: #{tpu_custom_call.1} parent=1 // pred_check
      _
    $region39: #{tpu_custom_call.1} parent=1 // pred_check_branch
      %1106 = sbr.rel (0) target = $region41
    $region40: #{tpu_custom_call.1} parent=1 // pred_region
      %1108 = dma.done [#allocation4], 128
    $region41: #{tpu_custom_call.1} parent=1 // pred_fallthru
      _
    %1109 = vsyncpa [#allocation3], 1
    %1110 = vsyncpa [#allocation4], 1

</llo_original>
